<compile_context>
chip_gen: v7x
topology: tpu7x:2x2x1
jax: 0.10.0
libtpu: 0.0.40
codegen_flags: <defaults>
</compile_context>

<pallas_src>
import functools

import jax
import jax.numpy as jnp
from jax.experimental import pallas as pl
from jax.experimental.pallas import tpu as pltpu

_MAX_TILE_B = 1024  # rows per grid step (multiple of 8); per-row footprint is tiny


def _mlp_kernel(x_ref, w1_ref, w2_ref, o_ref, *, d_in, hidden):
    """x_ref: [tb, D]; w1_ref: [D+1, H] (last row = b1); w2_ref: [H+1, C] (last row = b2);
    o_ref: [tb, C] compact output block."""
    tb = x_ref.shape[0]
    h_dim = w1_ref.shape[1]
    c_dim = w2_ref.shape[1]

    # fc1: accumulator initialised from the folded-in bias row, then unrolled
    # VPU broadcast-FMAs over the (tiny, D=4) input features.
    acc1 = jnp.broadcast_to(w1_ref[d_in:d_in + 1, :], (tb, h_dim))
    for d in range(d_in):
        acc1 = acc1 + x_ref[:, d:d + 1] * w1_ref[d:d + 1, :]
    hid = jax.nn.sigmoid(acc1)  # f32 elementwise on VPU/EUP

    # fc2: same trick over the hidden units (H=2).
    acc2 = jnp.broadcast_to(w2_ref[hidden:hidden + 1, :], (tb, c_dim))
    for j in range(hidden):
        acc2 = acc2 + hid[:, j:j + 1] * w2_ref[j:j + 1, :]

    o_ref[...] = acc2.astype(o_ref.dtype)  # compact (tb, C) store


def prepare_params(w1, b1, w2, b2):
    """One-time (per weight update) layout prep: fold each bias in as an extra row.

    w1: [D, H], b1: [H], w2: [H, C], b2: [C] -- kernel [in, out] layout
    (transposed relative to torch.nn.Linear.weight).
    """
    w1_aug = jnp.concatenate(
        [w1.astype(jnp.float32), b1.reshape(1, -1).astype(jnp.float32)], axis=0)
    w2_aug = jnp.concatenate(
        [w2.astype(jnp.float32), b2.reshape(1, -1).astype(jnp.float32)], axis=0)
    return w1_aug, w2_aug


def multiclass_forward(x, w1_aug, w2_aug):
    """x: [B, D] -> logits [B, C] (f32). w1_aug/w2_aug come from prepare_params()."""
    B, D = x.shape
    d_in, H = w1_aug.shape[0] - 1, w1_aug.shape[1]
    C = w2_aug.shape[1]
    assert D == d_in

    tile_b = B if B <= _MAX_TILE_B else _MAX_TILE_B
    grid = (pl.cdiv(B, tile_b),)

    flops = 2 * B * ((D + 1) * H + (H + 1) * C)
    bytes_accessed = 4 * (x.size + w1_aug.size + w2_aug.size + B * C)

    return pl.pallas_call(
        functools.partial(_mlp_kernel, d_in=D, hidden=H),
        out_shape=jax.ShapeDtypeStruct((B, C), jnp.float32),
        grid=grid,
        in_specs=[
            pl.BlockSpec((tile_b, D), lambda i: (i, 0)),       # batch-tiled input
            pl.BlockSpec((D + 1, H), lambda i: (0, 0)),        # weights resident in VMEM
            pl.BlockSpec((H + 1, C), lambda i: (0, 0)),
        ],
        out_specs=pl.BlockSpec((tile_b, C), lambda i: (i, 0)), # compact output
        compiler_params=pltpu.CompilerParams(
            dimension_semantics=("parallel",)),
        cost_estimate=pl.CostEstimate(
            flops=flops, transcendentals=B * H, bytes_accessed=bytes_accessed),
    )(x.astype(jnp.float32), w1_aug, w2_aug)


if __name__ == "__main__":
    # Iris-like config: input_dim=4, hidden_dim=2 (fixed in __init__), class_count=3.
    batch, input_dim, hidden_dim, class_count = 8, 4, 2, 3

    key = jax.random.PRNGKey(0)
    kx, kw1, kb1, kw2, kb2 = jax.random.split(key, 5)

    x = jax.random.normal(kx, (batch, input_dim), dtype=jnp.float32)
    # PyTorch Linear params, stored transposed for the kernel's [in, out] layout.
    w1 = jax.random.normal(kw1, (input_dim, hidden_dim), dtype=jnp.float32) * 0.5
    b1 = jax.random.normal(kb1, (hidden_dim,), dtype=jnp.float32) * 0.1
    w2 = jax.random.normal(kw2, (hidden_dim, class_count), dtype=jnp.float32) * 0.5
    b2 = jax.random.normal(kb2, (class_count,), dtype=jnp.float32) * 0.1

    # Parameter prep is hoisted out of the per-call path (done once per weight update).
    w1_aug, w2_aug = prepare_params(w1, b1, w2, b2)
    fwd = jax.jit(multiclass_forward)

    out = jax.block_until_ready(fwd(x, w1_aug, w2_aug))

    # Pure-JAX reference of the same forward semantics.
    ref = jnp.dot(jax.nn.sigmoid(jnp.dot(x, w1) + b1), w2) + b2
    assert out.shape == (batch, class_count)
    assert jnp.allclose(out, ref, atol=1e-5, rtol=1e-5)

    print("KERNEL_OK")
</pallas_src>

<mosaic_0001>
module attributes {stable_mosaic.version = 11 : i64} {
  func.func @_mlp_kernel(%arg0: i32, %arg1: memref<8x4xf32, #tpu.memory_space<vmem>>, %arg2: memref<5x2xf32, #tpu.memory_space<vmem>>, %arg3: memref<3x3xf32, #tpu.memory_space<vmem>>, %arg4: memref<8x3xf32, #tpu.memory_space<vmem>>) attributes {dimension_semantics = [#tpu.dimension_semantics<parallel>], iteration_bounds = array<i64: 1>, scalar_prefetch = 0 : i64, scratch_operands = 0 : i64, tpu.core_type = #tpu.core_type<tc>, window_params = [{transform_indices = @transform_0, window_bounds = array<i64: 8, 4>}, {pipeline_mode = #tpu.pipeline_mode<synchronous>, transform_indices = @transform_1, window_bounds = array<i64: 5, 2>}, {pipeline_mode = #tpu.pipeline_mode<synchronous>, transform_indices = @transform_2, window_bounds = array<i64: 3, 3>}, {transform_indices = @transform_3, window_bounds = array<i64: 8, 3>}]} {
    %c4 = arith.constant 4 : index
    %c0 = arith.constant 0 : index
    %0 = vector.load %arg2[%c4, %c0] : memref<5x2xf32, #tpu.memory_space<vmem>>, vector<1x2xf32>
    %1 = vector.shape_cast %0 : vector<1x2xf32> to vector<1x2xf32>
    %2 = vector.broadcast %1 : vector<1x2xf32> to vector<8x2xf32>
    %c0_0 = arith.constant 0 : index
    %c0_1 = arith.constant 0 : index
    %3 = vector.load %arg1[%c0_0, %c0_1] : memref<8x4xf32, #tpu.memory_space<vmem>>, vector<8x1xf32>
    %c0_2 = arith.constant 0 : index
    %c0_3 = arith.constant 0 : index
    %4 = vector.load %arg2[%c0_2, %c0_3] : memref<5x2xf32, #tpu.memory_space<vmem>>, vector<1x2xf32>
    %5 = vector.broadcast %3 : vector<8x1xf32> to vector<8x2xf32>
    %6 = vector.broadcast %4 : vector<1x2xf32> to vector<8x2xf32>
    %7 = arith.mulf %5, %6 : vector<8x2xf32>
    %8 = arith.addf %2, %7 : vector<8x2xf32>
    %c0_4 = arith.constant 0 : index
    %c1 = arith.constant 1 : index
    %9 = vector.load %arg1[%c0_4, %c1] : memref<8x4xf32, #tpu.memory_space<vmem>>, vector<8x1xf32>
    %c1_5 = arith.constant 1 : index
    %c0_6 = arith.constant 0 : index
    %10 = vector.load %arg2[%c1_5, %c0_6] : memref<5x2xf32, #tpu.memory_space<vmem>>, vector<1x2xf32>
    %11 = vector.broadcast %9 : vector<8x1xf32> to vector<8x2xf32>
    %12 = vector.broadcast %10 : vector<1x2xf32> to vector<8x2xf32>
    %13 = arith.mulf %11, %12 : vector<8x2xf32>
    %14 = arith.addf %8, %13 : vector<8x2xf32>
    %c0_7 = arith.constant 0 : index
    %c2 = arith.constant 2 : index
    %15 = vector.load %arg1[%c0_7, %c2] : memref<8x4xf32, #tpu.memory_space<vmem>>, vector<8x1xf32>
    %c2_8 = arith.constant 2 : index
    %c0_9 = arith.constant 0 : index
    %16 = vector.load %arg2[%c2_8, %c0_9] : memref<5x2xf32, #tpu.memory_space<vmem>>, vector<1x2xf32>
    %17 = vector.broadcast %15 : vector<8x1xf32> to vector<8x2xf32>
    %18 = vector.broadcast %16 : vector<1x2xf32> to vector<8x2xf32>
    %19 = arith.mulf %17, %18 : vector<8x2xf32>
    %20 = arith.addf %14, %19 : vector<8x2xf32>
    %c0_10 = arith.constant 0 : index
    %c3 = arith.constant 3 : index
    %21 = vector.load %arg1[%c0_10, %c3] : memref<8x4xf32, #tpu.memory_space<vmem>>, vector<8x1xf32>
    %c3_11 = arith.constant 3 : index
    %c0_12 = arith.constant 0 : index
    %22 = vector.load %arg2[%c3_11, %c0_12] : memref<5x2xf32, #tpu.memory_space<vmem>>, vector<1x2xf32>
    %23 = vector.broadcast %21 : vector<8x1xf32> to vector<8x2xf32>
    %24 = vector.broadcast %22 : vector<1x2xf32> to vector<8x2xf32>
    %25 = arith.mulf %23, %24 : vector<8x2xf32>
    %26 = arith.addf %20, %25 : vector<8x2xf32>
    %27 = arith.negf %26 : vector<8x2xf32>
    %28 = math.exp %27 : vector<8x2xf32>
    %cst = arith.constant 1.000000e+00 : f32
    %29 = vector.broadcast %cst : f32 to vector<8x2xf32>
    %30 = arith.addf %29, %28 : vector<8x2xf32>
    %31 = arith.divf %29, %30 : vector<8x2xf32>
    %c2_13 = arith.constant 2 : index
    %c0_14 = arith.constant 0 : index
    %32 = vector.load %arg3[%c2_13, %c0_14] : memref<3x3xf32, #tpu.memory_space<vmem>>, vector<1x3xf32>
    %33 = vector.shape_cast %32 : vector<1x3xf32> to vector<1x3xf32>
    %34 = vector.broadcast %33 : vector<1x3xf32> to vector<8x3xf32>
    %35 = vector.extract_strided_slice %31 {offsets = [0, 0], sizes = [8, 1], strides = [1, 1]} : vector<8x2xf32> to vector<8x1xf32>
    %c0_15 = arith.constant 0 : index
    %c0_16 = arith.constant 0 : index
    %36 = vector.load %arg3[%c0_15, %c0_16] : memref<3x3xf32, #tpu.memory_space<vmem>>, vector<1x3xf32>
    %37 = vector.broadcast %35 : vector<8x1xf32> to vector<8x3xf32>
    %38 = vector.broadcast %36 : vector<1x3xf32> to vector<8x3xf32>
    %39 = arith.mulf %37, %38 : vector<8x3xf32>
    %40 = arith.addf %34, %39 : vector<8x3xf32>
    %41 = vector.extract_strided_slice %31 {offsets = [0, 1], sizes = [8, 1], strides = [1, 1]} : vector<8x2xf32> to vector<8x1xf32>
    %c1_17 = arith.constant 1 : index
    %c0_18 = arith.constant 0 : index
    %42 = vector.load %arg3[%c1_17, %c0_18] : memref<3x3xf32, #tpu.memory_space<vmem>>, vector<1x3xf32>
    %43 = vector.broadcast %41 : vector<8x1xf32> to vector<8x3xf32>
    %44 = vector.broadcast %42 : vector<1x3xf32> to vector<8x3xf32>
    %45 = arith.mulf %43, %44 : vector<8x3xf32>
    %46 = arith.addf %40, %45 : vector<8x3xf32>
    %c0_19 = arith.constant 0 : index
    %c0_20 = arith.constant 0 : index
    %47 = vector.load %arg4[%c0_19, %c0_20] : memref<8x3xf32, #tpu.memory_space<vmem>>, vector<8x3xf32>
    tpu.vector_store %arg4[%c0_19, %c0_20], %46 {strides = array<i32>} : memref<8x3xf32, #tpu.memory_space<vmem>>, vector<8x3xf32>,
    return
  }
  func.func @transform_0(%arg0: i32) -> (i32, i32) {
    %c0_i32 = arith.constant 0 : i32
    %c0_i32_0 = arith.constant 0 : i32
    return %arg0, %c0_i32 : i32, i32
  }
  func.func @transform_1(%arg0: i32) -> (i32, i32) {
    %c0_i32 = arith.constant 0 : i32
    %c0_i32_0 = arith.constant 0 : i32
    %c0_i32_1 = arith.constant 0 : i32
    return %c0_i32, %c0_i32_0 : i32, i32
  }
  func.func @transform_2(%arg0: i32) -> (i32, i32) {
    %c0_i32 = arith.constant 0 : i32
    %c0_i32_0 = arith.constant 0 : i32
    %c0_i32_1 = arith.constant 0 : i32
    return %c0_i32, %c0_i32_0 : i32, i32
  }
  func.func @transform_3(%arg0: i32) -> (i32, i32) {
    %c0_i32 = arith.constant 0 : i32
    %c0_i32_0 = arith.constant 0 : i32
    return %arg0, %c0_i32 : i32, i32
  }
}

</mosaic_0001>

<llo_original>
// kernel: multiclass_forward.1
$region0: #{multiclass_forward.1}
  #allocation0 [shape = 'u32[]', space=smem, size = 0x4, offset = 0x4, fixed_abs, tag = 'smem constant byte address 0x4 - core index']
  #allocation1 [shape = 'u32[144,128]{1,0:T(1,128)}', space=vmem, size = 0x12000, scoped, tag = 'internal scratch']
  %s0 = inlined_call_operand.vmem [shape: f32[8,4], index: 0, kind: input, shape index: {}]
  %s1 = inlined_call_operand.vmem [shape: f32[5,2], index: 1, kind: input, shape index: {}]
  %s2 = inlined_call_operand.vmem [shape: f32[3,3], index: 2, kind: input, shape index: {}]
  %s3 = inlined_call_operand.vmem [shape: f32[8,3], index: 3, kind: output, shape index: {}]
  %s4 = sld [smem:[#allocation0]]
  $region22: #{multiclass_forward.1} parent=0
    _
  %s6 = ssub.s32 1, %s4
  %s7 = scalar_select 0, %s6, %s4
  // Predicated region
  $region2: #{multiclass_forward.1} parent=0 // pred_check
    _
  $region3: #{multiclass_forward.1} parent=0 // pred_check_branch
    %9 = sbr.rel (0) target = $region5
  $region4: #{multiclass_forward.1} parent=0 // pred_region
    _
  $region5: #{multiclass_forward.1} parent=0 // pred_fallthru
    _
  // Predicated region
  $region6: #{multiclass_forward.1} parent=0 // pred_check
    _
  $region7: #{multiclass_forward.1} parent=0 // pred_check_branch
    %11 = sbr.rel (0) target = $region9
  $region8: #{multiclass_forward.1} parent=0 // pred_region
    _
  $region9: #{multiclass_forward.1} parent=0 // pred_fallthru
    _
  // Predicated region
  $region10: #{multiclass_forward.1} parent=0 // pred_check
    _
  $region11: #{multiclass_forward.1} parent=0 // pred_check_branch
    %13 = sbr.rel (0) target = $region13
  $region12: #{multiclass_forward.1} parent=0 // pred_region
    _
  $region13: #{multiclass_forward.1} parent=0 // pred_fallthru
    _
  %v14 = vld [vmem:[%s1 + $0x4] sm:$0x1]
  %v15 = vlaneseq
  %v16 = vshrl.u32 %v15, 7
  %v17 = vsub.s32 0, %v16
  %v18 = vrot.slane %v14, %v17
  %v19 = vld [vmem:[%s0] sm:$0xff]
  %v20 = vld [vmem:[%s1] sm:$0x1]
  %22 = vset.pattern.permute.xlu0 0
  %23 = vperm.xlu0 %22, %v19
  %v24 = vpop.permute.xlu0 %23
  %v26 = vlaneseq
  %v27 = vshrl.u32 %v26, 7
  %v28 = vsub.s32 0, %v27
  %v29 = vrot.slane %v20, %v28
  %v30 = vmul.f32 %v24, %v29
  %v31 = vadd.f32 %v18, %v30
  %v32 = vld [vmem:[%s1 + $0x1] sm:$0x1]
  %33 = vset.pattern.permute.xlu0 1
  %34 = vperm.xlu0 %33, %v19
  %v35 = vpop.permute.xlu0 %34
  %v37 = vlaneseq
  %v38 = vshrl.u32 %v37, 7
  %v39 = vsub.s32 0, %v38
  %v40 = vrot.slane %v32, %v39
  %v41 = vmul.f32 %v35, %v40
  %v42 = vadd.f32 %v31, %v41
  %v43 = vld [vmem:[%s1 + $0x2] sm:$0x1]
  %44 = vset.pattern.permute.xlu0 2
  %45 = vperm.xlu0 %44, %v19
  %v46 = vpop.permute.xlu0 %45
  %v48 = vlaneseq
  %v49 = vshrl.u32 %v48, 7
  %v50 = vsub.s32 0, %v49
  %v51 = vrot.slane %v43, %v50
  %v52 = vmul.f32 %v46, %v51
  %v53 = vadd.f32 %v42, %v52
  %v54 = vld [vmem:[%s1 + $0x3] sm:$0x1]
  %55 = vset.pattern.permute.xlu0 3
  %56 = vperm.xlu0 %55, %v19
  %v57 = vpop.permute.xlu0 %56
  %v59 = vlaneseq
  %v60 = vshrl.u32 %v59, 7
  %v61 = vsub.s32 0, %v60
  %v62 = vrot.slane %v54, %v61
  %v63 = vmul.f32 %v57, %v62
  %v64 = vadd.f32 %v53, %v63
  %v65 = vxor.u32 %v64, 2147483648
  %v66 = vmul.f32 %v65, 1.442695
  %v67 = vpow.pop %v66
  %v68 = vadd.f32 %v67, 1.0
  %v69 = vrcp.pop %v68
  %v70 = vmul.f32 1.0, %v69
  %v71 = vld [vmem:[%s2 + $0x2] sm:$0x1]
  %v72 = vlaneseq
  %v73 = vshrl.u32 %v72, 7
  %v74 = vsub.s32 0, %v73
  %v75 = vrot.slane %v71, %v74
  %v76 = vld [vmem:[%s2] sm:$0x1]
  %78 = vset.pattern.permute.xlu0 0
  %79 = vperm.xlu0 %78, %v70
  %v80 = vpop.permute.xlu0 %79
  %v82 = vlaneseq
  %v83 = vshrl.u32 %v82, 7
  %v84 = vsub.s32 0, %v83
  %v85 = vrot.slane %v76, %v84
  %v86 = vmul.f32 %v80, %v85
  %v87 = vadd.f32 %v75, %v86
  %v88 = vld [vmem:[%s2 + $0x1] sm:$0x1]
  %89 = vset.pattern.permute.xlu0 1
  %90 = vperm.xlu0 %89, %v70
  %v91 = vpop.permute.xlu0 %90
  %v93 = vlaneseq
  %v94 = vshrl.u32 %v93, 7
  %v95 = vsub.s32 0, %v94
  %v96 = vrot.slane %v88, %v95
  %v97 = vmul.f32 %v91, %v96
  %v98 = vadd.f32 %v87, %v97
  %vm99 = vcmask 23552
  %100 = vst.msk [vmem:[%s3] sm:$0xff] %vm99, %v98
  // Predicated region
  $region14: #{multiclass_forward.1} parent=0 // pred_check
    _
  $region15: #{multiclass_forward.1} parent=0 // pred_check_branch
    %102 = sbr.rel (0) target = $region17
  $region16: #{multiclass_forward.1} parent=0 // pred_region
    _
  $region17: #{multiclass_forward.1} parent=0 // pred_fallthru
    _
  // Predicated region
  $region18: #{multiclass_forward.1} parent=0 // pred_check
    _
  $region19: #{multiclass_forward.1} parent=0 // pred_check_branch
    %104 = sbr.rel (0) target = $region21
  $region20: #{multiclass_forward.1} parent=0 // pred_region
    _
  $region21: #{multiclass_forward.1} parent=0 // pred_fallthru
    _

</llo_original>
